<compile_context>
chip_gen: v7x
topology: tpu7x:2x2x1
jax: 0.10.0
libtpu: 0.0.40
codegen_flags: <defaults>
</compile_context>

<pallas_src>
import functools

import jax
import jax.numpy as jnp
from jax.experimental import pallas as pl
from jax.experimental.pallas import tpu as pltpu


_SMALL_B_THRESHOLD = 512  # below this, per-step pipeline overhead dominates


# ----------------------------------------------------------------------------
# Shared embedding net (computed on VMEM-resident values inside the kernels).
# ----------------------------------------------------------------------------
def _embed(x, w1, b1, w2, b2, out_dtype, compute_dtype):
    """Linear(D->H) -> ReLU -> Linear(H->E).

    Matmul operands are optionally cast to `compute_dtype` (bf16 for native
    MXU throughput on v5e/v6e/v7x); accumulation stays f32 via
    preferred_element_type, and the bias add / ReLU stay f32.
    """
    if compute_dtype is not None:
        xd = x.astype(compute_dtype)
        w1d = w1.astype(compute_dtype)
        w2d = w2.astype(compute_dtype)
    else:
        xd, w1d, w2d = x, w1, w2
    h = jnp.dot(xd, w1d, preferred_element_type=jnp.float32) + b1   # (M, H)
    h = jnp.maximum(h, 0.0)                                         # ReLU, f32
    hd = h.astype(compute_dtype) if compute_dtype is not None else h
    out = jnp.dot(hd, w2d, preferred_element_type=jnp.float32) + b2  # (M, E)
    return out.astype(out_dtype)


# ----------------------------------------------------------------------------
# Kernels
# ----------------------------------------------------------------------------
def _triplet_small_kernel(x1_ref, x2_ref, x3_ref, w1_ref, b1_ref, w2_ref,
                          b2_ref, o1_ref, o2_ref, o3_ref, *, compute_dtype):
    # Grid-less tiny-B path: fuse the three members into one (3B, D) matmul
    # chain (better MXU row utilization at tiny B), then split the slab into
    # the three separate output refs inside the kernel (no wrapper slices).
    B = x1_ref.shape[0]
    x = jnp.concatenate([x1_ref[...], x2_ref[...], x3_ref[...]], axis=0)
    out = _embed(x, w1_ref[...], b1_ref[...], w2_ref[...], b2_ref[...],
                 o1_ref.dtype, compute_dtype)
    o1_ref[...] = out[:B]
    o2_ref[...] = out[B:2 * B]
    o3_ref[...] = out[2 * B:]


def _triplet_tiled_kernel(x1_ref, x2_ref, x3_ref, w1_ref, b1_ref, w2_ref,
                          b2_ref, o1_ref, o2_ref, o3_ref, *, compute_dtype):
    # Batch-tiled path: no concat (it would double the activation VMEM
    # footprint and spend vld/vst slots on a pure copy).  Run the shared net
    # on each member and write directly into its own output block.
    w1 = w1_ref[...]
    b1 = b1_ref[...]
    w2 = w2_ref[...]
    b2 = b2_ref[...]
    o1_ref[...] = _embed(x1_ref[...], w1, b1, w2, b2, o1_ref.dtype, compute_dtype)
    o2_ref[...] = _embed(x2_ref[...], w1, b1, w2, b2, o2_ref.dtype, compute_dtype)
    o3_ref[...] = _embed(x3_ref[...], w1, b1, w2, b2, o3_ref.dtype, compute_dtype)


def _single_kernel(x_ref, w1_ref, b1_ref, w2_ref, b2_ref, o_ref, *,
                   compute_dtype):
    o_ref[...] = _embed(x_ref[...], w1_ref[...], b1_ref[...], w2_ref[...],
                        b2_ref[...], o_ref.dtype, compute_dtype)


# ----------------------------------------------------------------------------
# Helpers
# ----------------------------------------------------------------------------
def _cost_estimate(n_rows, D, H, E, act_itemsize):
    flops = 2 * n_rows * (D * H + H * E)
    bytes_accessed = (n_rows * (D + E)) * act_itemsize \
        + (D * H + H + H * E + E) * 4
    return pl.CostEstimate(flops=flops, transcendentals=0,
                           bytes_accessed=bytes_accessed)


def _pick_batch_tile(B, D, H, E, act_itemsize):
    """Budget the batch tile so double-buffered activations (3 inputs + 3
    outputs) plus the f32 hidden intermediates stay under ~24 MiB — safe for
    v7x's 64 MiB physical / 32 MiB default-scoped VMEM, and a fortiori for
    v5e/v6e's 128 MiB."""
    budget = 24 * 1024 * 1024
    per_row = 2 * 3 * (D + E) * act_itemsize + 3 * H * 4
    tb = budget // max(per_row, 1)
    tb = int(max(8, min(tb, 2048, B)))
    return max(8, (tb // 8) * 8)   # sublane (8) alignment for the block shape


def _tiled_compiler_params():
    return pltpu.CompilerParams(
        dimension_semantics=("parallel",),        # shard batch across TCs (v7x)
        vmem_limit_bytes=48 * 1024 * 1024,        # explicit, leaves v7x headroom
    )


# ----------------------------------------------------------------------------
# Public wrappers (PyTorch-equivalent API)
# ----------------------------------------------------------------------------
def triplet_net_forward(x1, x2, x3, w1, b1, w2, b2, *,
                        batch_tile=None, compute_dtype=None):
    """Pallas equivalent of TripletNet.forward(x1, x2, x3)."""
    B, D = x1.shape
    H = w1.shape[1]
    E = w2.shape[1]
    b1 = b1.reshape(1, -1)   # accept PyTorch-style (H,)/(E,) biases
    b2 = b2.reshape(1, -1)

    out_shapes = tuple(jax.ShapeDtypeStruct((B, E), x1.dtype) for _ in range(3))
    cost = _cost_estimate(3 * B, D, H, E, x1.dtype.itemsize)

    if batch_tile is None and B <= _SMALL_B_THRESHOLD:
        # Whole problem fits comfortably in VMEM -> grid-less call, three
        # separate output refs written directly from the kernel.
        kern = functools.partial(_triplet_small_kernel,
                                 compute_dtype=compute_dtype)
        return pl.pallas_call(
            kern,
            out_shape=out_shapes,
            cost_estimate=cost,
        )(x1, x2, x3, w1, b1, w2, b2)

    # Large-B batch-tiled pipeline: activations streamed per-tile, weights
    # resident, DMA overlapped with MXU work by the BlockSpec pipeline.
    tb = batch_tile if batch_tile is not None else \
        _pick_batch_tile(B, D, H, E, x1.dtype.itemsize)
    tb = min(tb, B)
    grid = (pl.cdiv(B, tb),)

    x_spec = pl.BlockSpec((tb, D), lambda i: (i, 0))
    w1_spec = pl.BlockSpec((D, H), lambda i: (0, 0))
    b1_spec = pl.BlockSpec((1, H), lambda i: (0, 0))
    w2_spec = pl.BlockSpec((H, E), lambda i: (0, 0))
    b2_spec = pl.BlockSpec((1, E), lambda i: (0, 0))
    o_spec = pl.BlockSpec((tb, E), lambda i: (i, 0))

    kern = functools.partial(_triplet_tiled_kernel, compute_dtype=compute_dtype)
    return pl.pallas_call(
        kern,
        out_shape=out_shapes,
        grid_spec=pltpu.PrefetchScalarGridSpec(
            num_scalar_prefetch=0,
            grid=grid,
            in_specs=[x_spec, x_spec, x_spec,
                      w1_spec, b1_spec, w2_spec, b2_spec],
            out_specs=[o_spec, o_spec, o_spec],
        ),
        compiler_params=_tiled_compiler_params(),
        cost_estimate=cost,
    )(x1, x2, x3, w1, b1, w2, b2)


def get_embedding(x, w1, b1, w2, b2, *, batch_tile=None, compute_dtype=None):
    """Pallas equivalent of TripletNet.get_embedding(x) (dedicated path)."""
    B, D = x.shape
    H = w1.shape[1]
    E = w2.shape[1]
    b1 = b1.reshape(1, -1)
    b2 = b2.reshape(1, -1)

    cost = _cost_estimate(B, D, H, E, x.dtype.itemsize)
    kern = functools.partial(_single_kernel, compute_dtype=compute_dtype)

    if batch_tile is None and B <= _SMALL_B_THRESHOLD:
        return pl.pallas_call(
            kern,
            out_shape=jax.ShapeDtypeStruct((B, E), x.dtype),
            cost_estimate=cost,
        )(x, w1, b1, w2, b2)

    tb = batch_tile if batch_tile is not None else \
        _pick_batch_tile(B, D, H, E, x.dtype.itemsize)
    tb = min(tb, B)
    return pl.pallas_call(
        kern,
        out_shape=jax.ShapeDtypeStruct((B, E), x.dtype),
        grid_spec=pltpu.PrefetchScalarGridSpec(
            num_scalar_prefetch=0,
            grid=(pl.cdiv(B, tb),),
            in_specs=[pl.BlockSpec((tb, D), lambda i: (i, 0)),
                      pl.BlockSpec((D, H), lambda i: (0, 0)),
                      pl.BlockSpec((1, H), lambda i: (0, 0)),
                      pl.BlockSpec((H, E), lambda i: (0, 0)),
                      pl.BlockSpec((1, E), lambda i: (0, 0))],
            out_specs=pl.BlockSpec((tb, E), lambda i: (i, 0)),
        ),
        compiler_params=_tiled_compiler_params(),
        cost_estimate=cost,
    )(x, w1, b1, w2, b2)


# ----------------------------------------------------------------------------
# Reference + self-test
# ----------------------------------------------------------------------------
def _reference_embedding(x, w1, b1, w2, b2):
    h = jnp.maximum(x @ w1 + b1.reshape(1, -1), 0.0)
    return h @ w2 + b2.reshape(1, -1)


if __name__ == "__main__":
    D, H, E = 32, 64, 32
    B_BIG, B_SMALL, TB = 256, 8, 128

    key = jax.random.PRNGKey(0)
    k1, k2, k3, kw1, kb1, kw2, kb2 = jax.random.split(key, 7)

    # Triplet inputs (slice the first 8 rows for the tiny grid-less path).
    X1 = jax.random.normal(k1, (B_BIG, D), dtype=jnp.float32)
    X2 = jax.random.normal(k2, (B_BIG, D), dtype=jnp.float32)
    X3 = jax.random.normal(k3, (B_BIG, D), dtype=jnp.float32)

    # Shared embedding-net parameters (PyTorch nn.Linear layout: 1-D biases).
    w1 = jax.random.normal(kw1, (D, H), dtype=jnp.float32) * 0.1
    b1 = jax.random.normal(kb1, (H,), dtype=jnp.float32) * 0.1
    w2 = jax.random.normal(kw2, (H, E), dtype=jnp.float32) * 0.1
    b2 = jax.random.normal(kb2, (E,), dtype=jnp.float32) * 0.1

    R1 = _reference_embedding(X1, w1, b1, w2, b2)
    R2 = _reference_embedding(X2, w1, b1, w2, b2)
    R3 = _reference_embedding(X3, w1, b1, w2, b2)

    # --- 1. Tiny grid-less path (exact f32 parity) ---------------------------
    x1s, x2s, x3s = X1[:B_SMALL], X2[:B_SMALL], X3[:B_SMALL]
    o1, o2, o3 = triplet_net_forward(x1s, x2s, x3s, w1, b1, w2, b2)
    oe = get_embedding(x2s, w1, b1, w2, b2)
    jax.block_until_ready((o1, o2, o3, oe))
    assert o1.shape == (B_SMALL, E)
    assert jnp.allclose(o1, R1[:B_SMALL], atol=1e-5), "small output1 mismatch"
    assert jnp.allclose(o2, R2[:B_SMALL], atol=1e-5), "small output2 mismatch"
    assert jnp.allclose(o3, R3[:B_SMALL], atol=1e-5), "small output3 mismatch"
    assert jnp.allclose(oe, R2[:B_SMALL], atol=1e-5), "get_embedding mismatch"

    # --- 2. Batch-tiled pipelined path, f32 operands (exact parity) ----------
    t1, t2, t3 = triplet_net_forward(X1, X2, X3, w1, b1, w2, b2,
                                     batch_tile=TB)
    te = get_embedding(X2, w1, b1, w2, b2, batch_tile=TB)
    jax.block_until_ready((t1, t2, t3, te))
    assert t1.shape == (B_BIG, E)
    assert jnp.allclose(t1, R1, atol=1e-5), "tiled output1 mismatch"
    assert jnp.allclose(t2, R2, atol=1e-5), "tiled output2 mismatch"
    assert jnp.allclose(t3, R3, atol=1e-5), "tiled output3 mismatch"
    assert jnp.allclose(te, R2, atol=1e-5), "tiled get_embedding mismatch"

    # --- 3. Batch-tiled path, bf16 MXU operands (f32 accumulation) -----------
    q1, q2, q3 = triplet_net_forward(X1, X2, X3, w1, b1, w2, b2,
                                     batch_tile=TB,
                                     compute_dtype=jnp.bfloat16)
    jax.block_until_ready((q1, q2, q3))
    assert jnp.allclose(q1, R1, rtol=2e-2, atol=2e-2), "bf16 output1 mismatch"
    assert jnp.allclose(q2, R2, rtol=2e-2, atol=2e-2), "bf16 output2 mismatch"
    assert jnp.allclose(q3, R3, rtol=2e-2, atol=2e-2), "bf16 output3 mismatch"

    print("KERNEL_OK")
</pallas_src>

<mosaic_0001>
module attributes {stable_mosaic.version = 11 : i64} {
  func.func @_triplet_small_kernel(%arg0: memref<8x32xf32, #tpu.memory_space<vmem>>, %arg1: memref<8x32xf32, #tpu.memory_space<vmem>>, %arg2: memref<8x32xf32, #tpu.memory_space<vmem>>, %arg3: memref<32x64xf32, #tpu.memory_space<vmem>>, %arg4: memref<1x64xf32, #tpu.memory_space<vmem>>, %arg5: memref<64x32xf32, #tpu.memory_space<vmem>>, %arg6: memref<1x32xf32, #tpu.memory_space<vmem>>, %arg7: memref<8x32xf32, #tpu.memory_space<vmem>>, %arg8: memref<8x32xf32, #tpu.memory_space<vmem>>, %arg9: memref<8x32xf32, #tpu.memory_space<vmem>>) attributes {dimension_semantics = [], scalar_prefetch = 0 : i64, scratch_operands = 0 : i64, tpu.core_type = #tpu.core_type<tc>} {
    %c0 = arith.constant 0 : index
    %c0_0 = arith.constant 0 : index
    %0 = vector.load %arg0[%c0, %c0_0] : memref<8x32xf32, #tpu.memory_space<vmem>>, vector<8x32xf32>
    %c0_1 = arith.constant 0 : index
    %c0_2 = arith.constant 0 : index
    %1 = vector.load %arg1[%c0_1, %c0_2] : memref<8x32xf32, #tpu.memory_space<vmem>>, vector<8x32xf32>
    %c0_3 = arith.constant 0 : index
    %c0_4 = arith.constant 0 : index
    %2 = vector.load %arg2[%c0_3, %c0_4] : memref<8x32xf32, #tpu.memory_space<vmem>>, vector<8x32xf32>
    %3 = tpu.concatenate %0, %1, %2 in 0 : vector<8x32xf32>, vector<8x32xf32>, vector<8x32xf32> -> vector<24x32xf32>
    %c0_5 = arith.constant 0 : index
    %c0_6 = arith.constant 0 : index
    %4 = vector.load %arg3[%c0_5, %c0_6] : memref<32x64xf32, #tpu.memory_space<vmem>>, vector<32x64xf32>
    %c0_7 = arith.constant 0 : index
    %c0_8 = arith.constant 0 : index
    %5 = vector.load %arg4[%c0_7, %c0_8] : memref<1x64xf32, #tpu.memory_space<vmem>>, vector<1x64xf32>
    %c0_9 = arith.constant 0 : index
    %c0_10 = arith.constant 0 : index
    %6 = vector.load %arg5[%c0_9, %c0_10] : memref<64x32xf32, #tpu.memory_space<vmem>>, vector<64x32xf32>
    %c0_11 = arith.constant 0 : index
    %c0_12 = arith.constant 0 : index
    %7 = vector.load %arg6[%c0_11, %c0_12] : memref<1x32xf32, #tpu.memory_space<vmem>>, vector<1x32xf32>
    %cst = arith.constant dense<0.000000e+00> : vector<24x64xf32>
    %8 = tpu.matmul %3, %4, %cst {dimension_numbers = #tpu.dot_dimension_numbers<[1], [0], [0], [1], [0, 0, 1, 1], [], []>} : vector<24x32xf32>, vector<32x64xf32>, vector<24x64xf32> -> vector<24x64xf32>
    %9 = vector.broadcast %5 : vector<1x64xf32> to vector<24x64xf32>
    %10 = arith.addf %8, %9 : vector<24x64xf32>
    %cst_13 = arith.constant 0.000000e+00 : f32
    %11 = vector.broadcast %cst_13 : f32 to vector<24x64xf32>
    %12 = arith.maximumf %10, %11 : vector<24x64xf32>
    %cst_14 = arith.constant dense<0.000000e+00> : vector<24x32xf32>
    %13 = tpu.matmul %12, %6, %cst_14 {dimension_numbers = #tpu.dot_dimension_numbers<[1], [0], [0], [1], [0, 0, 1, 1], [], []>} : vector<24x64xf32>, vector<64x32xf32>, vector<24x32xf32> -> vector<24x32xf32>
    %14 = vector.broadcast %7 : vector<1x32xf32> to vector<24x32xf32>
    %15 = arith.addf %13, %14 : vector<24x32xf32>
    %16 = vector.extract_strided_slice %15 {offsets = [0, 0], sizes = [8, 32], strides = [1, 1]} : vector<24x32xf32> to vector<8x32xf32>
    %c0_15 = arith.constant 0 : index
    %c0_16 = arith.constant 0 : index
    %17 = vector.load %arg7[%c0_15, %c0_16] : memref<8x32xf32, #tpu.memory_space<vmem>>, vector<8x32xf32>
    tpu.vector_store %arg7[%c0_15, %c0_16], %16 {strides = array<i32>} : memref<8x32xf32, #tpu.memory_space<vmem>>, vector<8x32xf32>,
    %18 = vector.extract_strided_slice %15 {offsets = [8, 0], sizes = [8, 32], strides = [1, 1]} : vector<24x32xf32> to vector<8x32xf32>
    %c0_17 = arith.constant 0 : index
    %c0_18 = arith.constant 0 : index
    %19 = vector.load %arg8[%c0_17, %c0_18] : memref<8x32xf32, #tpu.memory_space<vmem>>, vector<8x32xf32>
    tpu.vector_store %arg8[%c0_17, %c0_18], %18 {strides = array<i32>} : memref<8x32xf32, #tpu.memory_space<vmem>>, vector<8x32xf32>,
    %20 = vector.extract_strided_slice %15 {offsets = [16, 0], sizes = [8, 32], strides = [1, 1]} : vector<24x32xf32> to vector<8x32xf32>
    %c0_19 = arith.constant 0 : index
    %c0_20 = arith.constant 0 : index
    %21 = vector.load %arg9[%c0_19, %c0_20] : memref<8x32xf32, #tpu.memory_space<vmem>>, vector<8x32xf32>
    tpu.vector_store %arg9[%c0_19, %c0_20], %20 {strides = array<i32>} : memref<8x32xf32, #tpu.memory_space<vmem>>, vector<8x32xf32>,
    return
  }
}

</mosaic_0001>

<llo_original>
// kernel: tpu_custom_call.1
$region0: #{tpu_custom_call.1}
  #allocation0 [shape = 'u32[]', space=smem, size = 0x4, offset = 0x4, fixed_abs, tag = 'smem constant byte address 0x4 - core index']
  #allocation1 [shape = 'u32[144,128]{1,0:T(1,128)}', space=vmem, size = 0x12000, scoped, tag = 'internal scratch']
  %s0 = inlined_call_operand.vmem [shape: f32[8,32], index: 0, kind: input, shape index: {}]
  %s1 = inlined_call_operand.vmem [shape: f32[8,32], index: 1, kind: input, shape index: {}]
  %s2 = inlined_call_operand.vmem [shape: f32[8,32], index: 2, kind: input, shape index: {}]
  %s3 = inlined_call_operand.vmem [shape: f32[32,64], index: 3, kind: input, shape index: {}]
  %s4 = inlined_call_operand.vmem [shape: f32[1,64], index: 4, kind: input, shape index: {}]
  %s5 = inlined_call_operand.vmem [shape: f32[64,32], index: 5, kind: input, shape index: {}]
  %s6 = inlined_call_operand.vmem [shape: f32[1,32], index: 6, kind: input, shape index: {}]
  %s7 = inlined_call_operand.hbm [shape: f32[8,32], index: 7, kind: output, shape index: {0}]
  %s8 = inlined_call_operand.hbm [shape: f32[8,32], index: 8, kind: output, shape index: {1}]
  %s9 = inlined_call_operand.hbm [shape: f32[8,32], index: 9, kind: output, shape index: {2}]
  %10 = xla_tuple %s7, %s8, %s9
  %s11 = sld [smem:[#allocation0]]
  $region54: #{tpu_custom_call.1} parent=0
    _
  %s13 = ssub.s32 1, %s11
  %s14 = scalar_select 0, %s13, %s11
  $region1: #{tpu_custom_call.1} parent=0
    #allocation2 [shape = 'u8[4096]{0}', space=vmem, size = 0x1000, scoped, tag = 'output window, operand 0, single buffered']
    #allocation3 [shape = 's32[1]{0}', space=sflag, size = 0x4, scoped, tag = 'scoped memory for tpu_custom_call.1']
    #allocation4 [shape = 'u8[4096]{0}', space=vmem, size = 0x1000, scoped, tag = 'output window, operand 1, single buffered']
    #allocation5 [shape = 's32[1]{0}', space=sflag, size = 0x4, scoped, tag = 'scoped memory for tpu_custom_call.1']
    #allocation6 [shape = 'u8[4096]{0}', space=vmem, size = 0x1000, scoped, tag = 'output window, operand 2, single buffered']
    %15 = vsyncpa [#allocation3], 0
    %16 = vsyncpa [#allocation5], 0
    // Predicated region
    $region2: #{tpu_custom_call.1} parent=1 // pred_check
      _
    $region3: #{tpu_custom_call.1} parent=1 // pred_check_branch
      %18 = sbr.rel (0) target = $region5
    $region4: #{tpu_custom_call.1} parent=1 // pred_region
      _
    $region5: #{tpu_custom_call.1} parent=1 // pred_fallthru
      _
    // Predicated region
    $region6: #{tpu_custom_call.1} parent=1 // pred_check
      _
    $region7: #{tpu_custom_call.1} parent=1 // pred_check_branch
      %20 = sbr.rel (0) target = $region9
    $region8: #{tpu_custom_call.1} parent=1 // pred_region
      _
    $region9: #{tpu_custom_call.1} parent=1 // pred_fallthru
      _
    // Predicated region
    $region10: #{tpu_custom_call.1} parent=1 // pred_check
      _
    $region11: #{tpu_custom_call.1} parent=1 // pred_check_branch
      %22 = sbr.rel (0) target = $region13
    $region12: #{tpu_custom_call.1} parent=1 // pred_region
      _
    $region13: #{tpu_custom_call.1} parent=1 // pred_fallthru
      _
    // Predicated region
    $region14: #{tpu_custom_call.1} parent=1 // pred_check
      _
    $region15: #{tpu_custom_call.1} parent=1 // pred_check_branch
      %24 = sbr.rel (0) target = $region17
    $region16: #{tpu_custom_call.1} parent=1 // pred_region
      _
    $region17: #{tpu_custom_call.1} parent=1 // pred_fallthru
      _
    // Predicated region
    $region18: #{tpu_custom_call.1} parent=1 // pred_check
      _
    $region19: #{tpu_custom_call.1} parent=1 // pred_check_branch
      %26 = sbr.rel (0) target = $region21
    $region20: #{tpu_custom_call.1} parent=1 // pred_region
      _
    $region21: #{tpu_custom_call.1} parent=1 // pred_fallthru
      _
    // Predicated region
    $region22: #{tpu_custom_call.1} parent=1 // pred_check
      _
    $region23: #{tpu_custom_call.1} parent=1 // pred_check_branch
      %28 = sbr.rel (0) target = $region25
    $region24: #{tpu_custom_call.1} parent=1 // pred_region
      _
    $region25: #{tpu_custom_call.1} parent=1 // pred_fallthru
      _
    // Predicated region
    $region26: #{tpu_custom_call.1} parent=1 // pred_check
      _
    $region27: #{tpu_custom_call.1} parent=1 // pred_check_branch
      %30 = sbr.rel (0) target = $region29
    $region28: #{tpu_custom_call.1} parent=1 // pred_region
      _
    $region29: #{tpu_custom_call.1} parent=1 // pred_fallthru
      _
    %v31 = vld [vmem:[%s0] sm:$0xff]
    %v32 = vld [vmem:[%s1] sm:$0xff]
    %v33 = vld [vmem:[%s2] sm:$0xff]
    %v34 = vld [vmem:[%s3] sm:$0xff]
    %v35 = vld [vmem:[%s3 + $0x8] sm:$0xff]
    %v36 = vld [vmem:[%s3 + $0x10] sm:$0xff]
    %v37 = vld [vmem:[%s3 + $0x18] sm:$0xff]
    %v38 = vld [vmem:[%s4] sm:$0x1]
    %v39 = vld [vmem:[%s5] sm:$0xff]
    %v40 = vld [vmem:[%s5 + $0x8] sm:$0xff]
    %v41 = vld [vmem:[%s5 + $0x10] sm:$0xff]
    %v42 = vld [vmem:[%s5 + $0x18] sm:$0xff]
    %v43 = vld [vmem:[%s5 + $0x20] sm:$0xff]
    %v44 = vld [vmem:[%s5 + $0x28] sm:$0xff]
    %v45 = vld [vmem:[%s5 + $0x30] sm:$0xff]
    %v46 = vld [vmem:[%s5 + $0x38] sm:$0xff]
    %v47 = vld [vmem:[%s6] sm:$0x1]
    %v49 = vlaneseq
    %v50 = vshrl.u32 %v49, 7
    %v51 = vsub.s32 0, %v50
    %v52 = vrot.slane %v38, %v51
    %vm54 = vcmask 261120
    %v56 = vsel %vm54, %v31, 0
    %v59 = vsel %vm54, %v32, 0
    %v62 = vsel %vm54, %v33, 0
    %64 = vmatprep.subr.mxu0 0.0
    %65 = vmatpush1.msra.mxu0 %v34
    %66 = vmatprep.subr.mxu0 0.0
    %67 = vmatpush1.msra.mxu0 %v35
    %68 = vmatprep.subr.mxu0 0.0
    %69 = vmatpush1.msra.mxu0 %v36
    %70 = vmatprep.subr.mxu0 0.0
    %71 = vmatpush1.msra.mxu0 %v37
    %72 = vmatprep.subr.mxu0 0.0
    %73 = vmatpush1.msra.mxu0 0.0
    %74 = vmatprep.subr.mxu0 0.0
    %75 = vmatpush1.msra.mxu0 0.0
    %76 = vmatprep.subr.mxu0 0.0
    %77 = vmatpush1.msra.mxu0 0.0
    %78 = vmatprep.subr.mxu0 0.0
    %79 = vmatpush1.msra.mxu0 0.0
    %80 = vmatprep.subr.mxu0 0.0
    %81 = vmatpush1.msra.mxu0 0.0
    %82 = vmatprep.subr.mxu0 0.0
    %83 = vmatpush1.msra.mxu0 0.0
    %84 = vmatprep.subr.mxu0 0.0
    %85 = vmatpush1.msra.mxu0 0.0
    %86 = vmatprep.subr.mxu0 0.0
    %87 = vmatpush1.msra.mxu0 0.0
    %88 = vmatprep.subr.mxu0 0.0
    %89 = vmatpush1.msra.mxu0 0.0
    %90 = vmatprep.subr.mxu0 0.0
    %91 = vmatpush1.msra.mxu0 0.0
    %92 = vmatprep.subr.mxu0 0.0
    %93 = vmatpush1.msra.mxu0 0.0
    %94 = vmatprep.subr.mxu0 0.0
    %95 = vmatpush1.msra.mxu0 0.0
    %96 = vmatprep.subr.mxu0 0.0
    %97 = vmatpush1.msra.mxu0 0.0
    %98 = vmatprep.subr.mxu0 0.0
    %99 = vmatpush1.msra.mxu0 0.0
    %100 = vmatprep.subr.mxu0 0.0
    %101 = vmatpush1.msra.mxu0 0.0
    %102 = vmatprep.subr.mxu0 0.0
    %103 = vmatpush1.msra.mxu0 0.0
    %104 = vmatprep.subr.mxu0 0.0
    %105 = vmatpush1.msra.mxu0 0.0
    %106 = vmatprep.subr.mxu0 0.0
    %107 = vmatpush1.msra.mxu0 0.0
    %108 = vmatprep.subr.mxu0 0.0
    %109 = vmatpush1.msra.mxu0 0.0
    %110 = vmatprep.subr.mxu0 0.0
    %111 = vmatpush1.msra.mxu0 0.0
    %112 = vmatprep.subr.mxu0 0.0
    %113 = vmatpush1.msra.mxu0 0.0
    %114 = vmatprep.subr.mxu0 0.0
    %115 = vmatpush1.msra.mxu0 0.0
    %116 = vmatprep.subr.mxu0 0.0
    %117 = vmatpush1.msra.mxu0 0.0
    %118 = vmatprep.subr.mxu0 0.0
    %119 = vmatpush1.msra.mxu0 0.0
    %120 = vmatprep.subr.mxu0 0.0
    %121 = vmatpush1.msra.mxu0 0.0
    %122 = vmatprep.subr.mxu0 0.0
    %123 = vmatpush1.msra.mxu0 0.0
    %124 = vmatprep.subr.mxu0 0.0
    %125 = vmatpush1.msra.mxu0 0.0
    %126 = vmatprep.subr.mxu0 0.0
    %127 = vmatpush1.msra.mxu0 0.0
    %128 = vmatprep.mubr.f32.mxu0 0.0
    %129 = vmatmul.mubr.f32.gmra.mrb[0].mxu0 %v56
    %v130 = vpop.f32.mrb[0].mxu0
    %v131 = vadd.f32 %v52, %v130
    %v132 = vpop.f32.mrb[0].mxu0
    %133 = vmatprep.mubr.f32.mxu0 0.0
    %134 = vmatmul.mubr.f32.gmra.mrb[0].mxu0 %v59
    %v135 = vpop.f32.mrb[0].mxu0
    %v136 = vadd.f32 %v52, %v135
    %v137 = vpop.f32.mrb[0].mxu0
    %138 = vmatprep.mubr.f32.mxu0 0.0
    %139 = vmatmul.mubr.f32.gmra.mrb[0].mxu0 %v62
    %v140 = vpop.f32.mrb[0].mxu0
    %v141 = vadd.f32 %v52, %v140
    %v142 = vpop.f32.mrb[0].mxu0
    %143 = vdwg.mxu0
    %v144 = vmax.f32 %v131, 0.0
    %v145 = vmax.f32 %v136, 0.0
    %v146 = vmax.f32 %v141, 0.0
    %v148 = vlaneseq
    %v149 = vshrl.u32 %v148, 7
    %v150 = vsub.s32 0, %v149
    %v151 = vrot.slane %v47, %v150
    %vm153 = vcmask 523264
    %v155 = vsel %vm153, %v144, 0
    %v158 = vsel %vm153, %v145, 0
    %v161 = vsel %vm153, %v146, 0
    %163 = vmatprep.subr.mxu0 0.0
    %164 = vmatpush1.msra.mxu0 %v39
    %165 = vmatprep.subr.mxu0 0.0
    %166 = vmatpush1.msra.mxu0 %v40
    %167 = vmatprep.subr.mxu0 0.0
    %168 = vmatpush1.msra.mxu0 %v41
    %169 = vmatprep.subr.mxu0 0.0
    %170 = vmatpush1.msra.mxu0 %v42
    %171 = vmatprep.subr.mxu0 0.0
    %172 = vmatpush1.msra.mxu0 %v43
    %173 = vmatprep.subr.mxu0 0.0
    %174 = vmatpush1.msra.mxu0 %v44
    %175 = vmatprep.subr.mxu0 0.0
    %176 = vmatpush1.msra.mxu0 %v45
    %177 = vmatprep.subr.mxu0 0.0
    %178 = vmatpush1.msra.mxu0 %v46
    %179 = vmatprep.subr.mxu0 0.0
    %180 = vmatpush1.msra.mxu0 0.0
    %181 = vmatprep.subr.mxu0 0.0
    %182 = vmatpush1.msra.mxu0 0.0
    %183 = vmatprep.subr.mxu0 0.0
    %184 = vmatpush1.msra.mxu0 0.0
    %185 = vmatprep.subr.mxu0 0.0
    %186 = vmatpush1.msra.mxu0 0.0
    %187 = vmatprep.subr.mxu0 0.0
    %188 = vmatpush1.msra.mxu0 0.0
    %189 = vmatprep.subr.mxu0 0.0
    %190 = vmatpush1.msra.mxu0 0.0
    %191 = vmatprep.subr.mxu0 0.0
    %192 = vmatpush1.msra.mxu0 0.0
    %193 = vmatprep.subr.mxu0 0.0
    %194 = vmatpush1.msra.mxu0 0.0
    %195 = vmatprep.subr.mxu0 0.0
    %196 = vmatpush1.msra.mxu0 0.0
    %197 = vmatprep.subr.mxu0 0.0
    %198 = vmatpush1.msra.mxu0 0.0
    %199 = vmatprep.subr.mxu0 0.0
    %200 = vmatpush1.msra.mxu0 0.0
    %201 = vmatprep.subr.mxu0 0.0
    %202 = vmatpush1.msra.mxu0 0.0
    %203 = vmatprep.subr.mxu0 0.0
    %204 = vmatpush1.msra.mxu0 0.0
    %205 = vmatprep.subr.mxu0 0.0
    %206 = vmatpush1.msra.mxu0 0.0
    %207 = vmatprep.subr.mxu0 0.0
    %208 = vmatpush1.msra.mxu0 0.0
    %209 = vmatprep.subr.mxu0 0.0
    %210 = vmatpush1.msra.mxu0 0.0
    %211 = vmatprep.subr.mxu0 0.0
    %212 = vmatpush1.msra.mxu0 0.0
    %213 = vmatprep.subr.mxu0 0.0
    %214 = vmatpush1.msra.mxu0 0.0
    %215 = vmatprep.subr.mxu0 0.0
    %216 = vmatpush1.msra.mxu0 0.0
    %217 = vmatprep.subr.mxu0 0.0
    %218 = vmatpush1.msra.mxu0 0.0
    %219 = vmatprep.subr.mxu0 0.0
    %220 = vmatpush1.msra.mxu0 0.0
    %221 = vmatprep.subr.mxu0 0.0
    %222 = vmatpush1.msra.mxu0 0.0
    %223 = vmatprep.subr.mxu0 0.0
    %224 = vmatpush1.msra.mxu0 0.0
    %225 = vmatprep.subr.mxu0 0.0
    %226 = vmatpush1.msra.mxu0 0.0
    %227 = vmatprep.mubr.f32.mxu0 0.0
    %228 = vmatmul.mubr.f32.gmra.mrb[0].mxu0 %v155
    %v229 = vpop.f32.mrb[0].mxu0
    %v230 = vadd.f32 %v151, %v229
    %v231 = vpop.f32.mrb[0].mxu0
    %232 = vmatprep.mubr.f32.mxu0 0.0
    %233 = vmatmul.mubr.f32.gmra.mrb[0].mxu0 %v158
    %v234 = vpop.f32.mrb[0].mxu0
    %v235 = vadd.f32 %v151, %v234
    %v236 = vpop.f32.mrb[0].mxu0
    %237 = vmatprep.mubr.f32.mxu0 0.0
    %238 = vmatmul.mubr.f32.gmra.mrb[0].mxu0 %v161
    %v239 = vpop.f32.mrb[0].mxu0
    %v240 = vadd.f32 %v151, %v239
    %v241 = vpop.f32.mrb[0].mxu0
    %242 = vdwg.mxu0
    %243 = vst.msk [vmem:[#allocation2] sm:$0xff] %vm54, %v230
    %244 = vst.msk [vmem:[#allocation4] sm:$0xff] %vm54, %v235
    %245 = vst.msk [vmem:[#allocation6] sm:$0xff] %vm54, %v240
    // Predicated region
    $region30: #{tpu_custom_call.1} parent=1 // pred_check
      _
    $region31: #{tpu_custom_call.1} parent=1 // pred_check_branch
      %247 = sbr.rel (0) target = $region33
    $region32: #{tpu_custom_call.1} parent=1 // pred_region
      %s249 = ssub.s32 128, 128
      %250 = vsyncadd [#allocation3], %s249
      %s252 = sshll.u32 [#allocation2], 4
      %s253 = int_to_ptr.vmem [resolvable:$true] %s252
      %255 = dma.vmem_to_hbm [thread:$0]  %s253, 128, %s7, [#allocation3]
    $region33: #{tpu_custom_call.1} parent=1 // pred_fallthru
      _
    // Predicated region
    $region34: #{tpu_custom_call.1} parent=1 // pred_check
      _
    $region35: #{tpu_custom_call.1} parent=1 // pred_check_branch
      %257 = sbr.rel (0) target = $region37
    $region36: #{tpu_custom_call.1} parent=1 // pred_region
      %s259 = ssub.s32 128, 128
      %260 = vsyncadd [#allocation5], %s259
      %s262 = sshll.u32 [#allocation4], 4
      %s263 = int_to_ptr.vmem [resolvable:$true] %s262
      %265 = dma.vmem_to_hbm [thread:$0]  %s263, 128, %s8, [#allocation5]
    $region37: #{tpu_custom_call.1} parent=1 // pred_fallthru
      _
    // Predicated region
    $region38: #{tpu_custom_call.1} parent=1 // pred_check
      _
    $region39: #{tpu_custom_call.1} parent=1 // pred_check_branch
      %267 = sbr.rel (0) target = $region41
    $region40: #{tpu_custom_call.1} parent=1 // pred_region
      %s269 = ssub.s32 128, 128
      %270 = vsyncadd [#allocation5], %s269
      %s272 = sshll.u32 [#allocation6], 4
      %s273 = int_to_ptr.vmem [resolvable:$true] %s272
      %275 = dma.vmem_to_hbm [thread:$0]  %s273, 128, %s9, [#allocation5]
    $region41: #{tpu_custom_call.1} parent=1 // pred_fallthru
      _
    // Predicated region
    $region42: #{tpu_custom_call.1} parent=1 // pred_check
      _
    $region43: #{tpu_custom_call.1} parent=1 // pred_check_branch
      %277 = sbr.rel (0) target = $region45
    $region44: #{tpu_custom_call.1} parent=1 // pred_region
      %278 = dma.done [#allocation3], 128
    $region45: #{tpu_custom_call.1} parent=1 // pred_fallthru
      _
    // Predicated region
    $region46: #{tpu_custom_call.1} parent=1 // pred_check
      _
    $region47: #{tpu_custom_call.1} parent=1 // pred_check_branch
      %280 = sbr.rel (0) target = $region49
    $region48: #{tpu_custom_call.1} parent=1 // pred_region
      %281 = dma.done [#allocation5], 128
    $region49: #{tpu_custom_call.1} parent=1 // pred_fallthru
      _
    // Predicated region
    $region50: #{tpu_custom_call.1} parent=1 // pred_check
      _
    $region51: #{tpu_custom_call.1} parent=1 // pred_check_branch
      %283 = sbr.rel (0) target = $region53
    $region52: #{tpu_custom_call.1} parent=1 // pred_region
      %284 = dma.done [#allocation5], 128
    $region53: #{tpu_custom_call.1} parent=1 // pred_fallthru
      _
    %285 = vsyncpa [#allocation3], 1
    %286 = vsyncpa [#allocation5], 1

</llo_original>
